<compile_context>
chip_gen: v6e
topology: v6e:2x2x1
jax: 0.10.0
libtpu: 0.0.40
codegen_flags: <defaults>
</compile_context>

<pallas_src>
import jax
import jax.numpy as jnp
from jax.experimental import pallas as pl
from jax.experimental.pallas import tpu as pltpu


def _round_up(n, k):
    return (n + k - 1) // k * k


def gated_attention_kernel(
    x_ref,       # (TM, C_in)       rows of x (producer dtype: f32 or bf16)
    wcat_t_ref,  # (2*A_pad, C_in)  [w1 | wg]^T fused first-stage weight (x dtype)
    bcat_ref,    # (2*A_pad, 1)     [b1 | bg] fused bias column (f32)
    coef_ref,    # (2*A_pad, 1)     [w2 | wt] fused second-stage coefficients (f32)
    scal_ref,    # (2,)  SMEM       [b2, bt]
    o_ref,       # (1, 1, TM)       lane-dense output block
):
    # pre[o, m] = sum_c Wcat^T[o, c] * x[m, c]  ->  (2*A_pad, TM), f32 accumulate.
    pre = jax.lax.dot_general(
        wcat_t_ref[...], x_ref[...],
        dimension_numbers=(((1,), (1,)), ((), ())),
        preferred_element_type=jnp.float32,
    ) + bcat_ref[...]

    a_pad = pre.shape[0] // 2            # static; multiple of 8 (sublane aligned)
    coef = coef_ref[...]

    # Disjoint sublane-aligned halves: first A_pad rows -> tanh (attention)
    # branch, last A_pad rows -> sigmoid (gate) branch.
    att = jnp.tanh(pre[:a_pad]) * coef[:a_pad]           # (A_pad, TM)
    gate = jax.nn.sigmoid(pre[a_pad:]) * coef[a_pad:]     # (A_pad, TM)

    # a1 = tanh(x@w1+b1) @ w2 + b2 ; g = sigmoid(x@wg+bg) @ wt  (XLU sublane
    # reductions instead of M=1 MXU matmuls).
    a1 = jnp.sum(att, axis=0, keepdims=True) + scal_ref[0]    # (1, TM)
    g = jnp.sum(gate, axis=0, keepdims=True)                  # (1, TM)

    # (a1 * a2) @ wt + bt  ==  a1 * g + bt   (exact refactor; a1 broadcasts over A)
    o_ref[...] = (a1 * g + scal_ref[1])[None]                 # (1, 1, TM)


def _choose_tile(m, c_in, dtype_bytes, a_pad):
    """Row tile sized by bytes: ~4 MiB of x per tile, capped by a v7x-safe VMEM budget."""
    lanes_c = _round_up(c_in, 128)        # VMEM lane-pads the last dim to 128
    # HBM side: amortize the ~0.35 us per-grid-step overhead.
    tm_hbm = (4 << 20) // max(1, c_in * dtype_bytes)
    # VMEM side: double-buffered x tile + f32 intermediates, fits v7x (64 MiB phys).
    per_row_vmem = 2 * lanes_c * dtype_bytes + 24 * a_pad
    tm_vmem = (20 << 20) // max(1, per_row_vmem)
    tm = max(128, min(tm_hbm, tm_vmem, 32768))
    tm = min(tm, _round_up(m, 128))       # don't over-tile tiny inputs
    tm = max(128, (tm // 128) * 128)      # multiple of 128 for lane-dense output
    # Prefer >= 2 tiles when there is enough work so v7x can use both TensorCores.
    if m > 2 * 128 and pl.cdiv(m, tm) == 1:
        tm = max(128, _round_up(pl.cdiv(m, 2), 128))
    return tm


def gated_attention_pallas(x, params):
    """x: (..., C_in) in the producer's dtype (f32 or bf16 -- never cast here).
    Returns (..., 1) float32."""
    w1, b1, w2, b2, wg, bg, wt, bt = params
    c_in, a_ch = w1.shape
    lead = x.shape[:-1]

    x2d = x.reshape(-1, c_in)
    m = x2d.shape[0]
    dtype_bytes = jnp.dtype(x2d.dtype).itemsize

    # ---- fold the tiny parameters into a few fused operands (wrapper side) ----
    # Pad A up to a multiple of 8 so the tanh/sigmoid halves are sublane aligned.
    # Padded rows are exact no-ops: tanh(0)*0 = 0 and sigmoid(0)*0 = 0.
    a_pad = _round_up(a_ch, 8)
    pad_a = a_pad - a_ch
    w1p = jnp.pad(w1, ((0, 0), (0, pad_a)))
    wgp = jnp.pad(wg, ((0, 0), (0, pad_a)))
    wcat_t = jnp.concatenate([w1p, wgp], axis=1).T.astype(x2d.dtype)   # (2A_pad, C_in)

    bcat = jnp.concatenate([jnp.pad(b1, (0, pad_a)),
                            jnp.pad(bg, (0, pad_a))]).astype(jnp.float32)
    bcat = bcat.reshape(2 * a_pad, 1)                                   # (2A_pad, 1)

    coef = jnp.concatenate([jnp.pad(w2[:, 0], (0, pad_a)),
                            jnp.pad(wt[:, 0], (0, pad_a))]).astype(jnp.float32)
    coef = coef.reshape(2 * a_pad, 1)                                   # (2A_pad, 1)

    scal = jnp.stack([b2.reshape(()), bt.reshape(())]).astype(jnp.float32)  # (2,)

    # ---- tiling: byte-scaled row tile, ragged last tile handled by Pallas ----
    tm = _choose_tile(m, c_in, dtype_bytes, a_pad)
    num_tiles = pl.cdiv(m, tm)     # no jnp.pad of x: partial last block is fine,
                                   # its undefined rows are sliced off below.

    lanes_c = _round_up(c_in, 128)
    vmem_est = (2 * tm * lanes_c * dtype_bytes             # double-buffered x tile
                + 3 * tm * 2 * a_pad * 4                   # f32 intermediates
                + 2 * 2 * a_pad * lanes_c * dtype_bytes    # resident fused weight
                + 2 * tm * 4                               # output blocks
                + (4 << 20))                               # slack
    vmem_limit = int(min(48 << 20, max(32 << 20, vmem_est)))

    grid_spec = pl.GridSpec(
        grid=(num_tiles,),
        in_specs=[
            # x rows: the only HBM-heavy stream (pipelined / double-buffered).
            pl.BlockSpec((tm, c_in), lambda i: (i, 0)),
            # Fused weight / bias / coef: resident (same block every step).
            pl.BlockSpec((2 * a_pad, c_in), lambda i: (0, 0)),
            pl.BlockSpec((2 * a_pad, 1), lambda i: (0, 0)),
            pl.BlockSpec((2 * a_pad, 1), lambda i: (0, 0)),
            pl.BlockSpec(memory_space=pltpu.MemorySpace.SMEM),   # [b2, bt] scalars
        ],
        # Lane-dense output: one (1, tm) row per grid step (3-D so the last two
        # block dims equal the full array dims -> unmasked vst).
        out_specs=pl.BlockSpec((1, 1, tm), lambda i: (i, 0, 0)),
    )

    out3d = pl.pallas_call(
        gated_attention_kernel,
        out_shape=jax.ShapeDtypeStruct((num_tiles, 1, tm), jnp.float32),
        grid_spec=grid_spec,
        compiler_params=pltpu.CompilerParams(
            # Row axis is embarrassingly parallel -> lets v7x shard across its 2 TCs.
            dimension_semantics=("parallel",),
            vmem_limit_bytes=vmem_limit,
        ),
    )(x2d, wcat_t, bcat, coef, scal)

    out = out3d.reshape(-1)[:m]          # tiles are consecutive row chunks of x2d
    return out.reshape(*lead, 1)


def init_params(key, in_channels, attention_channels):
    """Deterministic synthetic init (uniform, torch-Linear-like fan-in scaling)."""
    ks = jax.random.split(key, 8)

    def lin(kw, kb, fan_in, fan_out):
        bound = 1.0 / jnp.sqrt(fan_in)
        w = jax.random.uniform(kw, (fan_in, fan_out), jnp.float32, -bound, bound)
        b = jax.random.uniform(kb, (fan_out,), jnp.float32, -bound, bound)
        return w, b

    w1, b1 = lin(ks[0], ks[1], in_channels, attention_channels)   # att[0]
    w2, b2 = lin(ks[2], ks[3], attention_channels, 1)             # att[2]
    wg, bg = lin(ks[4], ks[5], in_channels, attention_channels)   # gate[0]
    wt, bt = lin(ks[6], ks[7], attention_channels, 1)             # w_t
    return (w1, b1, w2, b2, wg, bg, wt, bt)


def gated_attention_ref(x, params):
    """Pure-JAX reference matching the PyTorch forward."""
    w1, b1, w2, b2, wg, bg, wt, bt = params
    a1 = jnp.tanh(x @ w1 + b1) @ w2 + b2
    a2 = jax.nn.sigmoid(x @ wg + bg)
    a3 = a1 * a2
    return a3 @ wt + bt


if __name__ == "__main__":
    batch, seq, in_channels, attention_channels = 2, 8, 32, 16

    key = jax.random.PRNGKey(0)
    kx, kp = jax.random.split(key)
    x = jax.random.normal(kx, (batch, seq, in_channels), jnp.float32)
    params = init_params(kp, in_channels, attention_channels)

    ref = gated_attention_ref(x, params)

    # f32 path (exact semantics).
    out = jax.block_until_ready(gated_attention_pallas(x, params))
    assert out.shape == (batch, seq, 1), out.shape
    assert jnp.allclose(out, ref, atol=1e-4, rtol=1e-4), (
        float(jnp.max(jnp.abs(out - ref)))
    )

    # bf16 path: x arrives already narrow from the "producer" (cast is outside the
    # wrapper on purpose); only the pre-activations lose precision, f32 accumulate.
    x_bf16 = x.astype(jnp.bfloat16)
    out_bf16 = jax.block_until_ready(gated_attention_pallas(x_bf16, params))
    assert jnp.allclose(out_bf16, ref, atol=5e-2, rtol=5e-2), (
        float(jnp.max(jnp.abs(out_bf16 - ref)))
    )

    print("KERNEL_OK")
</pallas_src>

<mosaic_0001>
module attributes {stable_mosaic.version = 11 : i64} {
  func.func @gated_attention_kernel(%arg0: i32, %arg1: memref<128x32xf32, #tpu.memory_space<vmem>>, %arg2: memref<32x32xf32, #tpu.memory_space<vmem>>, %arg3: memref<32x1xf32, #tpu.memory_space<vmem>>, %arg4: memref<32x1xf32, #tpu.memory_space<vmem>>, %arg5: memref<2xf32, #tpu.memory_space<smem>>, %arg6: memref<1x1x128xf32, #tpu.memory_space<vmem>>) attributes {dimension_semantics = [#tpu.dimension_semantics<parallel>], iteration_bounds = array<i64: 1>, scalar_prefetch = 0 : i64, scratch_operands = 0 : i64, tpu.core_type = #tpu.core_type<tc>, window_params = [{transform_indices = @transform_0, window_bounds = array<i64: 128, 32>}, {pipeline_mode = #tpu.pipeline_mode<synchronous>, transform_indices = @transform_1, window_bounds = array<i64: 32, 32>}, {pipeline_mode = #tpu.pipeline_mode<synchronous>, transform_indices = @transform_2, window_bounds = array<i64: 32, 1>}, {pipeline_mode = #tpu.pipeline_mode<synchronous>, transform_indices = @transform_3, window_bounds = array<i64: 32, 1>}, {transform_indices = @transform_4, window_bounds = array<i64: 2>}, {transform_indices = @transform_5, window_bounds = array<i64: 1, 1, 128>}]} {
    %c0 = arith.constant 0 : index
    %c0_0 = arith.constant 0 : index
    %0 = vector.load %arg2[%c0, %c0_0] : memref<32x32xf32, #tpu.memory_space<vmem>>, vector<32x32xf32>
    %c0_1 = arith.constant 0 : index
    %c0_2 = arith.constant 0 : index
    %1 = vector.load %arg1[%c0_1, %c0_2] : memref<128x32xf32, #tpu.memory_space<vmem>>, vector<128x32xf32>
    %cst = arith.constant dense<0.000000e+00> : vector<32x128xf32>
    %2 = tpu.matmul %0, %1, %cst {dimension_numbers = #tpu.dot_dimension_numbers<[1], [1], [0], [0], [0, 0, 1, 0], [], []>} : vector<32x32xf32>, vector<128x32xf32>, vector<32x128xf32> -> vector<32x128xf32>
    %c0_3 = arith.constant 0 : index
    %c0_4 = arith.constant 0 : index
    %3 = vector.load %arg3[%c0_3, %c0_4] : memref<32x1xf32, #tpu.memory_space<vmem>>, vector<32x1xf32>
    %4 = vector.broadcast %3 : vector<32x1xf32> to vector<32x128xf32>
    %5 = arith.addf %2, %4 : vector<32x128xf32>
    %c0_5 = arith.constant 0 : index
    %c0_6 = arith.constant 0 : index
    %6 = vector.load %arg4[%c0_5, %c0_6] : memref<32x1xf32, #tpu.memory_space<vmem>>, vector<32x1xf32>
    %7 = vector.extract_strided_slice %5 {offsets = [0, 0], sizes = [16, 128], strides = [1, 1]} : vector<32x128xf32> to vector<16x128xf32>
    %8 = math.tanh %7 : vector<16x128xf32>
    %9 = vector.extract_strided_slice %6 {offsets = [0, 0], sizes = [16, 1], strides = [1, 1]} : vector<32x1xf32> to vector<16x1xf32>
    %10 = vector.broadcast %9 : vector<16x1xf32> to vector<16x128xf32>
    %11 = arith.mulf %8, %10 : vector<16x128xf32>
    %12 = vector.extract_strided_slice %5 {offsets = [16, 0], sizes = [16, 128], strides = [1, 1]} : vector<32x128xf32> to vector<16x128xf32>
    %13 = arith.negf %12 : vector<16x128xf32>
    %14 = math.exp %13 : vector<16x128xf32>
    %cst_7 = arith.constant 1.000000e+00 : f32
    %15 = vector.broadcast %cst_7 : f32 to vector<16x128xf32>
    %16 = arith.addf %15, %14 : vector<16x128xf32>
    %17 = arith.divf %15, %16 : vector<16x128xf32>
    %18 = vector.extract_strided_slice %6 {offsets = [16, 0], sizes = [16, 1], strides = [1, 1]} : vector<32x1xf32> to vector<16x1xf32>
    %19 = vector.broadcast %18 : vector<16x1xf32> to vector<16x128xf32>
    %20 = arith.mulf %17, %19 : vector<16x128xf32>
    %cst_8 = arith.constant dense<0.000000e+00> : vector<128xf32>
    %21 = vector.multi_reduction <add>, %11, %cst_8 [0] : vector<16x128xf32> to vector<128xf32>
    %22 = vector.shape_cast %21 : vector<128xf32> to vector<1x128xf32>
    %c0_9 = arith.constant 0 : index
    %23 = memref.load %arg5[%c0_9] : memref<2xf32, #tpu.memory_space<smem>>
    %24 = vector.broadcast %23 : f32 to vector<1x128xf32>
    %25 = arith.addf %22, %24 : vector<1x128xf32>
    %cst_10 = arith.constant dense<0.000000e+00> : vector<128xf32>
    %26 = vector.multi_reduction <add>, %20, %cst_10 [0] : vector<16x128xf32> to vector<128xf32>
    %27 = vector.shape_cast %26 : vector<128xf32> to vector<1x128xf32>
    %28 = arith.mulf %25, %27 : vector<1x128xf32>
    %c1 = arith.constant 1 : index
    %29 = memref.load %arg5[%c1] : memref<2xf32, #tpu.memory_space<smem>>
    %30 = vector.broadcast %29 : f32 to vector<1x128xf32>
    %31 = arith.addf %28, %30 : vector<1x128xf32>
    %32 = vector.shape_cast %31 : vector<1x128xf32> to vector<1x1x128xf32>
    %c0_11 = arith.constant 0 : index
    %c0_12 = arith.constant 0 : index
    %c0_13 = arith.constant 0 : index
    %33 = vector.load %arg6[%c0_11, %c0_12, %c0_13] : memref<1x1x128xf32, #tpu.memory_space<vmem>>, vector<1x1x128xf32>
    tpu.vector_store %arg6[%c0_11, %c0_12, %c0_13], %32 {strides = array<i32>} : memref<1x1x128xf32, #tpu.memory_space<vmem>>, vector<1x1x128xf32>,
    return
  }
  func.func @transform_0(%arg0: i32) -> (i32, i32) {
    %c0_i32 = arith.constant 0 : i32
    %c0_i32_0 = arith.constant 0 : i32
    return %arg0, %c0_i32 : i32, i32
  }
  func.func @transform_1(%arg0: i32) -> (i32, i32) {
    %c0_i32 = arith.constant 0 : i32
    %c0_i32_0 = arith.constant 0 : i32
    %c0_i32_1 = arith.constant 0 : i32
    return %c0_i32, %c0_i32_0 : i32, i32
  }
  func.func @transform_2(%arg0: i32) -> (i32, i32) {
    %c0_i32 = arith.constant 0 : i32
    %c0_i32_0 = arith.constant 0 : i32
    %c0_i32_1 = arith.constant 0 : i32
    return %c0_i32, %c0_i32_0 : i32, i32
  }
  func.func @transform_3(%arg0: i32) -> (i32, i32) {
    %c0_i32 = arith.constant 0 : i32
    %c0_i32_0 = arith.constant 0 : i32
    %c0_i32_1 = arith.constant 0 : i32
    return %c0_i32, %c0_i32_0 : i32, i32
  }
  func.func @transform_4(%arg0: i32) -> i32 {
    %c0_i32 = arith.constant 0 : i32
    %c0_i32_0 = arith.constant 0 : i32
    return %c0_i32 : i32
  }
  func.func @transform_5(%arg0: i32) -> (i32, i32, i32) {
    %c0_i32 = arith.constant 0 : i32
    %c0_i32_0 = arith.constant 0 : i32
    %c0_i32_1 = arith.constant 0 : i32
    return %arg0, %c0_i32, %c0_i32_0 : i32, i32, i32
  }
}

</mosaic_0001>

<llo_original>
// kernel: tpu_custom_call.1
$region0: #{tpu_custom_call.1}
  #allocation0 [shape = 'u32[]', space=smem, size = 0x4, offset = 0x4, fixed_abs, tag = 'smem constant byte address 0x4 - core index']
  #allocation1 [shape = 'u32[144,128]{1,0:T(1,128)}', space=vmem, size = 0x12000, scoped, tag = 'internal scratch']
  %s0 = inlined_call_operand.vmem [shape: f32[16,32], index: 0, kind: input, shape index: {}]
  %s1 = inlined_call_operand.vmem [shape: f32[32,32], index: 1, kind: input, shape index: {}]
  %s2 = inlined_call_operand.vmem [shape: f32[32,1], index: 2, kind: input, shape index: {}]
  %s3 = inlined_call_operand.vmem [shape: f32[32,1], index: 3, kind: input, shape index: {}]
  %s4 = inlined_call_operand.vmem [shape: f32[2], index: 4, kind: input, shape index: {}]
  %s5 = inlined_call_operand.hbm [shape: f32[1,1,128], index: 5, kind: output, shape index: {}]
  %s6 = sld [smem:[#allocation0]]
  $region34: #{tpu_custom_call.1} parent=0
    _
  %s8 = ssub.s32 1, %s6
  %s9 = scalar_select 0, %s8, %s6
  $region1: #{tpu_custom_call.1} parent=0
    #allocation2 [shape = 'u8[512]{0}', space=smem, size = 0x200, scoped, tag = 'input window, operand 4, single buffered']
    #allocation3 [shape = 's32[1]{0}', space=sflag, size = 0x4, scoped, tag = 'scoped memory for tpu_custom_call.1']
    #allocation4 [shape = 's32[1]{0}', space=sflag, size = 0x4, scoped, tag = 'scoped memory for tpu_custom_call.1']
    #allocation5 [shape = 'u8[512]{0}', space=vmem, size = 0x400, scoped, tag = 'output window, operand 0, single buffered']
    %10 = vsyncpa [#allocation4], 0
    %11 = vsyncpa [#allocation3], 0
    // Predicated region
    $region2: #{tpu_custom_call.1} parent=1 // pred_check
      _
    $region3: #{tpu_custom_call.1} parent=1 // pred_check_branch
      %13 = sbr.rel (0) target = $region5
    $region4: #{tpu_custom_call.1} parent=1 // pred_region
      _
    $region5: #{tpu_custom_call.1} parent=1 // pred_fallthru
      _
    // Predicated region
    $region6: #{tpu_custom_call.1} parent=1 // pred_check
      _
    $region7: #{tpu_custom_call.1} parent=1 // pred_check_branch
      %15 = sbr.rel (0) target = $region9
    $region8: #{tpu_custom_call.1} parent=1 // pred_region
      _
    $region9: #{tpu_custom_call.1} parent=1 // pred_fallthru
      _
    // Predicated region
    $region10: #{tpu_custom_call.1} parent=1 // pred_check
      _
    $region11: #{tpu_custom_call.1} parent=1 // pred_check_branch
      %17 = sbr.rel (0) target = $region13
    $region12: #{tpu_custom_call.1} parent=1 // pred_region
      _
    $region13: #{tpu_custom_call.1} parent=1 // pred_fallthru
      _
    // Predicated region
    $region14: #{tpu_custom_call.1} parent=1 // pred_check
      _
    $region15: #{tpu_custom_call.1} parent=1 // pred_check_branch
      %19 = sbr.rel (0) target = $region17
    $region16: #{tpu_custom_call.1} parent=1 // pred_region
      _
    $region17: #{tpu_custom_call.1} parent=1 // pred_fallthru
      _
    // Predicated region
    $region18: #{tpu_custom_call.1} parent=1 // pred_check
      _
    $region19: #{tpu_custom_call.1} parent=1 // pred_check_branch
      %21 = sbr.rel (0) target = $region21
    $region20: #{tpu_custom_call.1} parent=1 // pred_region
      %s23 = ssub.s32 16, 16
      %24 = vsyncadd [#allocation4], %s23
      %s26 = sshll.u32 %s4, 4
      %s27 = int_to_ptr.vmem [resolvable:$true] %s26
      %29 = dma.vmem_to_smem %s27, 16, [#allocation2], [#allocation4]
    $region21: #{tpu_custom_call.1} parent=1 // pred_fallthru
      _
    // Predicated region
    $region22: #{tpu_custom_call.1} parent=1 // pred_check
      _
    $region23: #{tpu_custom_call.1} parent=1 // pred_check_branch
      %31 = sbr.rel (0) target = $region25
    $region24: #{tpu_custom_call.1} parent=1 // pred_region
      %32 = dma.done [#allocation4], 16
    $region25: #{tpu_custom_call.1} parent=1 // pred_fallthru
      _
    %33 = sfence
    %v34 = vld [vmem:[%s1] sm:$0xff]
    %v35 = vld [vmem:[%s1 + $0x8] sm:$0xff]
    %v36 = vld [vmem:[%s1 + $0x10] sm:$0xff]
    %v37 = vld [vmem:[%s1 + $0x18] sm:$0xff]
    %v38 = vld [vmem:[%s0] sm:$0xff]
    %v39 = vld [vmem:[%s0 + $0x8] sm:$0xff]
    %v40 = vld [vmem:[%s0 + $0x10] sm:$0xff]
    %v41 = vld [vmem:[%s0 + $0x18] sm:$0xff]
    %v42 = vld [vmem:[%s0 + $0x20] sm:$0xff]
    %v43 = vld [vmem:[%s0 + $0x28] sm:$0xff]
    %v44 = vld [vmem:[%s0 + $0x30] sm:$0xff]
    %v45 = vld [vmem:[%s0 + $0x38] sm:$0xff]
    %v46 = vld [vmem:[%s0 + $0x40] sm:$0xff]
    %v47 = vld [vmem:[%s0 + $0x48] sm:$0xff]
    %v48 = vld [vmem:[%s0 + $0x50] sm:$0xff]
    %v49 = vld [vmem:[%s0 + $0x58] sm:$0xff]
    %v50 = vld [vmem:[%s0 + $0x60] sm:$0xff]
    %v51 = vld [vmem:[%s0 + $0x68] sm:$0xff]
    %v52 = vld [vmem:[%s0 + $0x70] sm:$0xff]
    %v53 = vld [vmem:[%s0 + $0x78] sm:$0xff]
    %v54 = vld [vmem:[%s2] sm:$0xff]
    %v55 = vld [vmem:[%s2 + $0x8] sm:$0xff]
    %v56 = vld [vmem:[%s2 + $0x10] sm:$0xff]
    %v57 = vld [vmem:[%s2 + $0x18] sm:$0xff]
    %59 = vset.pattern.permute.xlu0 0
    %60 = vperm.xlu0 %59, %v54
    %v61 = vpop.permute.xlu0 %60
    %64 = vset.pattern.permute.xlu0 0
    %65 = vperm.xlu0 %64, %v55
    %v66 = vpop.permute.xlu0 %65
    %69 = vset.pattern.permute.xlu0 0
    %70 = vperm.xlu0 %69, %v56
    %v71 = vpop.permute.xlu0 %70
    %74 = vset.pattern.permute.xlu0 0
    %75 = vperm.xlu0 %74, %v57
    %v76 = vpop.permute.xlu0 %75
    %vm78 = vcmask 261120
    %v80 = vsel %vm78, %v34, 0
    %v83 = vsel %vm78, %v35, 0
    %v86 = vsel %vm78, %v36, 0
    %v89 = vsel %vm78, %v37, 0
    %v92 = vsel %vm78, %v38, 0
    %v95 = vsel %vm78, %v39, 0
    %v98 = vsel %vm78, %v40, 0
    %v101 = vsel %vm78, %v41, 0
    %v104 = vsel %vm78, %v42, 0
    %v107 = vsel %vm78, %v43, 0
    %v110 = vsel %vm78, %v44, 0
    %v113 = vsel %vm78, %v45, 0
    %v116 = vsel %vm78, %v46, 0
    %v119 = vsel %vm78, %v47, 0
    %v122 = vsel %vm78, %v48, 0
    %v125 = vsel %vm78, %v49, 0
    %v128 = vsel %vm78, %v50, 0
    %v131 = vsel %vm78, %v51, 0
    %v134 = vsel %vm78, %v52, 0
    %v137 = vsel %vm78, %v53, 0
    %139 = vmatprep.subr.mxu0 0.0
    %140 = vmatpush1.xpose.msra.mxu0 %v137
    %141 = vmatprep.subr.mxu0 0.0
    %142 = vmatpush1.xpose.msra.mxu0 %v134
    %143 = vmatprep.subr.mxu0 0.0
    %144 = vmatpush1.xpose.msra.mxu0 %v131
    %145 = vmatprep.subr.mxu0 0.0
    %146 = vmatpush1.xpose.msra.mxu0 %v128
    %147 = vmatprep.subr.mxu0 0.0
    %148 = vmatpush1.xpose.msra.mxu0 %v125
    %149 = vmatprep.subr.mxu0 0.0
    %150 = vmatpush1.xpose.msra.mxu0 %v122
    %151 = vmatprep.subr.mxu0 0.0
    %152 = vmatpush1.xpose.msra.mxu0 %v119
    %153 = vmatprep.subr.mxu0 0.0
    %154 = vmatpush1.xpose.msra.mxu0 %v116
    %155 = vmatprep.subr.mxu0 0.0
    %156 = vmatpush1.xpose.msra.mxu0 %v113
    %157 = vmatprep.subr.mxu0 0.0
    %158 = vmatpush1.xpose.msra.mxu0 %v110
    %159 = vmatprep.subr.mxu0 0.0
    %160 = vmatpush1.xpose.msra.mxu0 %v107
    %161 = vmatprep.subr.mxu0 0.0
    %162 = vmatpush1.xpose.msra.mxu0 %v104
    %163 = vmatprep.subr.mxu0 0.0
    %164 = vmatpush1.xpose.msra.mxu0 %v101
    %165 = vmatprep.subr.mxu0 0.0
    %166 = vmatpush1.xpose.msra.mxu0 %v98
    %167 = vmatprep.subr.mxu0 0.0
    %168 = vmatpush1.xpose.msra.mxu0 %v95
    %169 = vmatprep.subr.mxu0 0.0
    %170 = vmatpush1.xpose.msra.mxu0 %v92
    %171 = vmatprep.subr.mxu0 0.0
    %172 = vmatpush2.xpose.msra.mxu0 0.0
    %173 = vmatprep.subr.mxu0 0.0
    %174 = vmatpush2.xpose.msra.mxu0 0.0
    %175 = vmatprep.subr.mxu0 0.0
    %176 = vmatpush2.xpose.msra.mxu0 0.0
    %177 = vmatprep.subr.mxu0 0.0
    %178 = vmatpush2.xpose.msra.mxu0 0.0
    %179 = vmatprep.subr.mxu0 0.0
    %180 = vmatpush2.xpose.msra.mxu0 0.0
    %181 = vmatprep.subr.mxu0 0.0
    %182 = vmatpush2.xpose.msra.mxu0 0.0
    %183 = vmatprep.subr.mxu0 0.0
    %184 = vmatpush2.xpose.msra.mxu0 0.0
    %185 = vmatprep.subr.mxu0 0.0
    %186 = vmatpush2.xpose.msra.mxu0 0.0
    %187 = vmatprep.subr.mxu0 0.0
    %188 = vmatpush2.xpose.msra.mxu0 0.0
    %189 = vmatprep.subr.mxu0 0.0
    %190 = vmatpush2.xpose.msra.mxu0 0.0
    %191 = vmatprep.subr.mxu0 0.0
    %192 = vmatpush2.xpose.msra.mxu0 0.0
    %193 = vmatprep.subr.mxu0 0.0
    %194 = vmatpush2.xpose.msra.mxu0 0.0
    %195 = vmatprep.subr.mxu0 0.0
    %196 = vmatpush2.xpose.msra.mxu0 0.0
    %197 = vmatprep.subr.mxu0 0.0
    %198 = vmatpush2.xpose.msra.mxu0 0.0
    %199 = vmatprep.subr.mxu0 0.0
    %200 = vmatpush2.xpose.msra.mxu0 0.0
    %201 = vmatprep.subr.mxu0 0.0
    %202 = vmatpush2.xpose.msra.mxu0 0.0
    %203 = vmatprep.mubr.f32.mxu0 0.0
    %204 = vmatmul.mubr.f32.gmra.mxu0 %v80
    %v205 = vpop.f32.mrf.mxu0
    %v206 = vadd.f32 %v61, %v205
    %v207 = vpop.f32.mrf.mxu0
    %208 = vmatprep.mubr.f32.mxu0 0.0
    %209 = vmatmul.mubr.f32.gmra.mxu0 %v83
    %v210 = vpop.f32.mrf.mxu0
    %v211 = vadd.f32 %v66, %v210
    %v212 = vpop.f32.mrf.mxu0
    %213 = vmatprep.mubr.f32.mxu0 0.0
    %214 = vmatmul.mubr.f32.gmra.mxu0 %v86
    %v215 = vpop.f32.mrf.mxu0
    %v216 = vadd.f32 %v71, %v215
    %v217 = vpop.f32.mrf.mxu0
    %218 = vmatprep.mubr.f32.mxu0 0.0
    %219 = vmatmul.mubr.f32.gmra.mxu0 %v89
    %v220 = vpop.f32.mrf.mxu0
    %v221 = vadd.f32 %v76, %v220
    %v222 = vpop.f32.mrf.mxu0
    %223 = vdwg.mxu0
    %v224 = vld [vmem:[%s3] sm:$0xff]
    %v225 = vld [vmem:[%s3 + $0x8] sm:$0xff]
    %v226 = vld [vmem:[%s3 + $0x10] sm:$0xff]
    %v227 = vld [vmem:[%s3 + $0x18] sm:$0xff]
    %v228 = vtanh.pop %v206
    %v229 = vtanh.pop %v211
    %231 = vset.pattern.permute.xlu0 0
    %232 = vperm.xlu0 %231, %v224
    %v233 = vpop.permute.xlu0 %232
    %236 = vset.pattern.permute.xlu0 0
    %237 = vperm.xlu0 %236, %v225
    %v238 = vpop.permute.xlu0 %237
    %v240 = vmul.f32 %v228, %v233
    %v241 = vmul.f32 %v229, %v238
    %v242 = vxor.u32 %v216, 2147483648
    %v243 = vxor.u32 %v221, 2147483648
    %v244 = vmul.f32 %v242, 1.442695
    %v245 = vpow.pop %v244
    %v246 = vmul.f32 %v243, 1.442695
    %v247 = vpow.pop %v246
    %v248 = vadd.f32 %v245, 1.0
    %v249 = vadd.f32 %v247, 1.0
    %v250 = vrcp.pop %v248
    %v251 = vmul.f32 1.0, %v250
    %v252 = vrcp.pop %v249
    %v253 = vmul.f32 1.0, %v252
    %255 = vset.pattern.permute.xlu0 0
    %256 = vperm.xlu0 %255, %v226
    %v257 = vpop.permute.xlu0 %256
    %260 = vset.pattern.permute.xlu0 0
    %261 = vperm.xlu0 %260, %v227
    %v262 = vpop.permute.xlu0 %261
    %v264 = vmul.f32 %v251, %v257
    %v265 = vmul.f32 %v253, %v262
    %v266 = vadd.f32 %v240, %v241
    %v267 = vrot.slane %v266, 4
    %v268 = vadd.f32 %v266, %v267
    %v269 = vrot.slane %v268, 2
    %v270 = vadd.f32 %v268, %v269
    %v271 = vrot.slane %v270, 1
    %v272 = vadd.f32 %v270, %v271
    %s273 = sld [smem:[#allocation2]]
    %v274 = vstv %s273
    %v275 = vadd.f32 %v272, %v274
    %v276 = vadd.f32 %v264, %v265
    %v277 = vrot.slane %v276, 4
    %v278 = vadd.f32 %v276, %v277
    %v279 = vrot.slane %v278, 2
    %v280 = vadd.f32 %v278, %v279
    %v281 = vrot.slane %v280, 1
    %v282 = vadd.f32 %v280, %v281
    %v283 = vmul.f32 %v275, %v282
    %s284 = sld [smem:[#allocation2 + $0x1]]
    %v285 = vstv %s284
    %v286 = vadd.f32 %v283, %v285
    %287 = vst [vmem:[#allocation5] sm:$0x1] %v286
    // Predicated region
    $region26: #{tpu_custom_call.1} parent=1 // pred_check
      _
    $region27: #{tpu_custom_call.1} parent=1 // pred_check_branch
      %289 = sbr.rel (0) target = $region29
    $region28: #{tpu_custom_call.1} parent=1 // pred_region
      %s291 = ssub.s32 16, 16
      %292 = vsyncadd [#allocation3], %s291
      %s294 = sshll.u32 [#allocation5], 4
      %s295 = int_to_ptr.vmem [resolvable:$true] %s294
      %297 = dma.vmem_to_hbm [thread:$0]  %s295, 16, %s5, [#allocation3]
    $region29: #{tpu_custom_call.1} parent=1 // pred_fallthru
      _
    // Predicated region
    $region30: #{tpu_custom_call.1} parent=1 // pred_check
      _
    $region31: #{tpu_custom_call.1} parent=1 // pred_check_branch
      %299 = sbr.rel (0) target = $region33
    $region32: #{tpu_custom_call.1} parent=1 // pred_region
      %300 = dma.done [#allocation3], 16
    $region33: #{tpu_custom_call.1} parent=1 // pred_fallthru
      _
    %301 = vsyncpa [#allocation3], 1
    %302 = vsyncpa [#allocation4], 1

</llo_original>
